<compile_context>
chip_gen: v7x
topology: tpu7x:2x2x1
jax: 0.10.0
libtpu: 0.0.40
codegen_flags: <defaults>
</compile_context>

<pallas_src>
import functools

import jax
import jax.numpy as jnp
from jax import lax
from jax.experimental import pallas as pl
from jax.experimental.pallas import tpu as pltpu


def _double_conv_residual_kernel(
    x_ref,      # (1, Cin, H*W)    one batch element, channels-in-sublane, pixels-in-lane
    w1_ref,     # (Cmid, 9*Cin)    conv1 weight in im2col layout
    s1_ref,     # (Cmid, 1)        folded BN1 scale
    t1_ref,     # (Cmid, 1)        folded BN1 shift
    w2_ref,     # (Cout, 9*Cmid)   conv2 weight in im2col layout
    s2_ref,     # (Cout, 1)        folded BN2 scale
    tf_ref,     # (Cout, 1)        folded shift: BN2 shift + BN2 scale*conv2 bias + residual bias
    wr_ref,     # (Cout, Cin)      residual 1x1 conv weight
    out_ref,    # (1, Cout, H*W)
    *, H, W,
):
    HW = H * W
    x = x_ref[0]                                          # (Cin, HW)

    # Flat spatial index (lane axis) and its column coordinate; used to mask
    # the out-of-image taps of the 3x3 convs (replaces zero padding).
    p = lax.broadcasted_iota(jnp.int32, (1, HW), 1)
    px = p % W

    # Precompute (shift, mask) for the 9 taps once; shared by both convs.
    taps = []
    for sy in (-1, 0, 1):
        for sx in (-1, 0, 1):
            conds = []
            if sy == -1:
                conds.append(p >= W)
            elif sy == 1:
                conds.append(p < (H - 1) * W)
            if sx == -1:
                conds.append(px >= 1)
            elif sx == 1:
                conds.append(px <= W - 2)
            okf = None
            if conds:
                ok = conds[0]
                for c in conds[1:]:
                    ok = jnp.logical_and(ok, c)
                okf = ok.astype(jnp.float32)
            shift = (-(sy * W + sx)) % HW
            taps.append((shift, okf))

    def im2col(a):
        # Build the (9*C, HW) patch matrix: 9 spatially shifted copies of `a`
        # (lane-axis rolls on the XLU, masked at the image border) stacked
        # along the contraction axis, so each 3x3 conv is ONE MXU matmul
        # with K = 9*C instead of nine K=C matmuls accumulated on the VPU.
        cols = []
        for shift, okf in taps:
            col = a if shift == 0 else pltpu.roll(a, shift=shift, axis=1)
            if okf is not None:
                col = col * okf
            cols.append(col)
        return jnp.concatenate(cols, axis=0)

    # conv1 (3x3, no bias) -> folded BN1 -> ReLU
    acc1 = jnp.dot(w1_ref[...], im2col(x), preferred_element_type=jnp.float32)
    h1 = jnp.maximum(acc1 * s1_ref[...] + t1_ref[...], 0.0)          # (Cmid, HW)

    # conv2 (3x3); its bias and BN2 are folded into s2 / tf
    acc2 = jnp.dot(w2_ref[...], im2col(h1), preferred_element_type=jnp.float32)

    # residual 1x1 conv (its bias is folded into tf)
    res = jnp.dot(wr_ref[...], x, preferred_element_type=jnp.float32)

    # final ReLU
    out_ref[0] = jnp.maximum(acc2 * s2_ref[...] + res + tf_ref[...], 0.0)


def double_conv_residual(x_nchw, params, eps=1e-5):
    """Fused DoubleConvResidual forward.  x_nchw: (N, Cin, H, W) float32 (PyTorch layout)."""
    N, Cin, H, W = x_nchw.shape
    Cmid = params["w1"].shape[0]
    Cout = params["w2"].shape[0]
    HW = H * W

    # Free reshape of contiguous trailing dims; no transpose, no jnp.pad.
    x_flat = x_nchw.reshape(N, Cin, HW).astype(jnp.float32)

    # im2col weight matrices: OIHW (C_out, C_in, 3, 3) -> (C_out, 9*C_in),
    # with K index = (ky*3 + kx)*C_in + ci matching the kernel's tap order.
    w1m = jnp.transpose(params["w1"], (0, 2, 3, 1)).reshape(Cmid, 9 * Cin).astype(jnp.float32)
    w2m = jnp.transpose(params["w2"], (0, 2, 3, 1)).reshape(Cout, 9 * Cmid).astype(jnp.float32)
    wrm = params["wr"].reshape(Cout, Cin).astype(jnp.float32)

    # Fold inference-mode BN + conv2 bias + residual bias into per-channel
    # scale/shift vectors laid out channel-in-sublane ((C, 1)).
    s1v = params["gamma1"] / jnp.sqrt(params["var1"] + eps)
    t1v = params["beta1"] - params["mean1"] * s1v
    s2v = params["gamma2"] / jnp.sqrt(params["var2"] + eps)
    t2v = params["beta2"] - params["mean2"] * s2v
    tfv = t2v + s2v * params["b2"] + params["br"]

    s1 = s1v.reshape(Cmid, 1).astype(jnp.float32)
    t1 = t1v.reshape(Cmid, 1).astype(jnp.float32)
    s2 = s2v.reshape(Cout, 1).astype(jnp.float32)
    tf = tfv.reshape(Cout, 1).astype(jnp.float32)

    kernel = functools.partial(_double_conv_residual_kernel, H=H, W=W)

    out_flat = pl.pallas_call(
        kernel,
        out_shape=jax.ShapeDtypeStruct((N, Cout, HW), jnp.float32),
        grid=(N,),
        in_specs=[
            pl.BlockSpec((1, Cin, HW), lambda n: (n, 0, 0)),
            pl.BlockSpec((Cmid, 9 * Cin), lambda n: (0, 0)),
            pl.BlockSpec((Cmid, 1), lambda n: (0, 0)),
            pl.BlockSpec((Cmid, 1), lambda n: (0, 0)),
            pl.BlockSpec((Cout, 9 * Cmid), lambda n: (0, 0)),
            pl.BlockSpec((Cout, 1), lambda n: (0, 0)),
            pl.BlockSpec((Cout, 1), lambda n: (0, 0)),
            pl.BlockSpec((Cout, Cin), lambda n: (0, 0)),
        ],
        out_specs=pl.BlockSpec((1, Cout, HW), lambda n: (n, 0, 0)),
        # Batch elements are independent: let Mosaic shard the grid across
        # both TensorCores on v7x (no-op on v5e/v6e).
        compiler_params=pltpu.CompilerParams(
            dimension_semantics=("parallel",)),
    )(x_flat, w1m, s1, t1, w2m, s2, tf, wrm)

    return out_flat.reshape(N, Cout, H, W)


def reference_forward(x, params, eps=1e-5):
    """Pure-JAX NCHW reference of the same forward pass (for verification)."""
    dn = ("NCHW", "OIHW", "NCHW")

    def bn(y, g, b, m, v):
        return ((y - m[None, :, None, None]) / jnp.sqrt(v + eps)[None, :, None, None]
                * g[None, :, None, None] + b[None, :, None, None])

    y1 = lax.conv_general_dilated(x, params["w1"], (1, 1), "SAME", dimension_numbers=dn)
    h1 = jnp.maximum(bn(y1, params["gamma1"], params["beta1"],
                        params["mean1"], params["var1"]), 0.0)
    y2 = lax.conv_general_dilated(h1, params["w2"], (1, 1), "SAME", dimension_numbers=dn) \
        + params["b2"][None, :, None, None]
    y2 = bn(y2, params["gamma2"], params["beta2"], params["mean2"], params["var2"])
    x2 = lax.conv_general_dilated(x, params["wr"], (1, 1), "SAME", dimension_numbers=dn) \
        + params["br"][None, :, None, None]
    return jnp.maximum(y2 + x2, 0.0)


def init_params(key, in_channels, out_channels, mid_channels=None):
    if mid_channels is None:
        mid_channels = out_channels
    ks = jax.random.split(key, 12)
    return {
        # conv1: 3x3, in -> mid, no bias   (OIHW, PyTorch layout)
        "w1": 0.1 * jax.random.normal(ks[0], (mid_channels, in_channels, 3, 3), jnp.float32),
        # BN1 (inference stats)
        "gamma1": 1.0 + 0.1 * jax.random.normal(ks[1], (mid_channels,), jnp.float32),
        "beta1": 0.1 * jax.random.normal(ks[2], (mid_channels,), jnp.float32),
        "mean1": 0.1 * jax.random.normal(ks[3], (mid_channels,), jnp.float32),
        "var1": 1.0 + 0.1 * jax.random.uniform(ks[4], (mid_channels,), jnp.float32),
        # conv2: 3x3, mid -> out, with bias
        "w2": 0.1 * jax.random.normal(ks[5], (out_channels, mid_channels, 3, 3), jnp.float32),
        "b2": 0.1 * jax.random.normal(ks[6], (out_channels,), jnp.float32),
        # BN2
        "gamma2": 1.0 + 0.1 * jax.random.normal(ks[7], (out_channels,), jnp.float32),
        "beta2": 0.1 * jax.random.normal(ks[8], (out_channels,), jnp.float32),
        "mean2": 0.1 * jax.random.normal(ks[9], (out_channels,), jnp.float32),
        "var2": 1.0 + 0.1 * jax.random.uniform(ks[10], (out_channels,), jnp.float32),
        # residual 1x1 conv: in -> out, with bias   (OIHW)
        "wr": 0.1 * jax.random.normal(ks[11], (out_channels, in_channels, 1, 1), jnp.float32),
        "br": 0.1 * jax.random.normal(jax.random.fold_in(key, 99), (out_channels,), jnp.float32),
    }


if __name__ == "__main__":
    key = jax.random.PRNGKey(0)
    N, Cin, H, W = 2, 4, 16, 16          # NCHW, like the PyTorch module
    Cout = 8

    kx, kp = jax.random.split(key)
    x_nchw = jax.random.normal(kx, (N, Cin, H, W), jnp.float32)
    params = init_params(kp, in_channels=Cin, out_channels=Cout)

    out = jax.block_until_ready(double_conv_residual(x_nchw, params))
    ref = jax.block_until_ready(reference_forward(x_nchw, params))

    assert out.shape == (N, Cout, H, W)
    max_err = float(jnp.max(jnp.abs(out - ref)))
    assert jnp.allclose(out, ref, atol=2e-4, rtol=2e-4), f"max abs err = {max_err}"

    print("KERNEL_OK")
</pallas_src>

<mosaic_0001>
module attributes {stable_mosaic.version = 11 : i64} {
  func.func @_double_conv_residual_kernel(%arg0: i32, %arg1: memref<1x4x256xf32, #tpu.memory_space<vmem>>, %arg2: memref<8x36xf32, #tpu.memory_space<vmem>>, %arg3: memref<8x1xf32, #tpu.memory_space<vmem>>, %arg4: memref<8x1xf32, #tpu.memory_space<vmem>>, %arg5: memref<8x72xf32, #tpu.memory_space<vmem>>, %arg6: memref<8x1xf32, #tpu.memory_space<vmem>>, %arg7: memref<8x1xf32, #tpu.memory_space<vmem>>, %arg8: memref<8x4xf32, #tpu.memory_space<vmem>>, %arg9: memref<1x8x256xf32, #tpu.memory_space<vmem>>) attributes {dimension_semantics = [#tpu.dimension_semantics<parallel>], iteration_bounds = array<i64: 2>, scalar_prefetch = 0 : i64, scratch_operands = 0 : i64, tpu.core_type = #tpu.core_type<tc>, window_params = [{transform_indices = @transform_0, window_bounds = array<i64: 1, 4, 256>}, {pipeline_mode = #tpu.pipeline_mode<synchronous>, transform_indices = @transform_1, window_bounds = array<i64: 8, 36>}, {pipeline_mode = #tpu.pipeline_mode<synchronous>, transform_indices = @transform_2, window_bounds = array<i64: 8, 1>}, {pipeline_mode = #tpu.pipeline_mode<synchronous>, transform_indices = @transform_3, window_bounds = array<i64: 8, 1>}, {pipeline_mode = #tpu.pipeline_mode<synchronous>, transform_indices = @transform_4, window_bounds = array<i64: 8, 72>}, {pipeline_mode = #tpu.pipeline_mode<synchronous>, transform_indices = @transform_5, window_bounds = array<i64: 8, 1>}, {pipeline_mode = #tpu.pipeline_mode<synchronous>, transform_indices = @transform_6, window_bounds = array<i64: 8, 1>}, {pipeline_mode = #tpu.pipeline_mode<synchronous>, transform_indices = @transform_7, window_bounds = array<i64: 8, 4>}, {transform_indices = @transform_8, window_bounds = array<i64: 1, 8, 256>}]} {
    %c0 = arith.constant 0 : index
    %c0_0 = arith.constant 0 : index
    %c0_1 = arith.constant 0 : index
    %0 = vector.load %arg1[%c0, %c0_0, %c0_1] : memref<1x4x256xf32, #tpu.memory_space<vmem>>, vector<1x4x256xf32>
    %1 = vector.shape_cast %0 : vector<1x4x256xf32> to vector<4x256xf32>
    %2 = tpu.iota {dimensions = array<i32: 1>} : vector<1x256xi32>
    %c16_i32 = arith.constant 16 : i32
    %c0_i32 = arith.constant 0 : i32
    %3 = arith.cmpi eq, %c16_i32, %c0_i32 : i32
    %c1_i32 = arith.constant 1 : i32
    %4 = arith.select %3, %c1_i32, %c16_i32 : i32
    %5 = vector.broadcast %4 : i32 to vector<1x256xi32>
    %6 = arith.remsi %2, %5 : vector<1x256xi32>
    %c0_i32_2 = arith.constant 0 : i32
    %7 = vector.broadcast %c0_i32_2 : i32 to vector<1x256xi32>
    %8 = arith.cmpi ne, %6, %7 : vector<1x256xi32>
    %c0_i32_3 = arith.constant 0 : i32
    %9 = vector.broadcast %c0_i32_3 : i32 to vector<1x256xi32>
    %10 = arith.cmpi slt, %6, %9 : vector<1x256xi32>
    %c0_i32_4 = arith.constant 0 : i32
    %11 = arith.cmpi slt, %4, %c0_i32_4 : i32
    %12 = vector.broadcast %11 : i1 to vector<1x256xi1>
    %13 = vector.broadcast %12 : vector<1x256xi1> to vector<1x256xi1>
    %14 = arith.xori %10, %13 : vector<1x256xi1>
    %15 = arith.andi %14, %8 : vector<1x256xi1>
    %16 = vector.broadcast %4 : i32 to vector<1x256xi32>
    %17 = arith.addi %6, %16 : vector<1x256xi32>
    %18 = arith.select %15, %17, %6 : vector<1x256xi1>, vector<1x256xi32>
    %c16_i32_5 = arith.constant 16 : i32
    %19 = vector.broadcast %c16_i32_5 : i32 to vector<1x256xi32>
    %20 = arith.cmpi sge, %2, %19 : vector<1x256xi32>
    %c1_i32_6 = arith.constant 1 : i32
    %21 = vector.broadcast %c1_i32_6 : i32 to vector<1x256xi32>
    %22 = arith.cmpi sge, %18, %21 : vector<1x256xi32>
    %23 = arith.andi %20, %22 : vector<1x256xi1>
    %24 = arith.extui %23 : vector<1x256xi1> to vector<1x256xi32>
    %25 = arith.sitofp %24 : vector<1x256xi32> to vector<1x256xf32>
    %c16_i32_7 = arith.constant 16 : i32
    %26 = vector.broadcast %c16_i32_7 : i32 to vector<1x256xi32>
    %27 = arith.cmpi sge, %2, %26 : vector<1x256xi32>
    %28 = arith.extui %27 : vector<1x256xi1> to vector<1x256xi32>
    %29 = arith.sitofp %28 : vector<1x256xi32> to vector<1x256xf32>
    %c16_i32_8 = arith.constant 16 : i32
    %30 = vector.broadcast %c16_i32_8 : i32 to vector<1x256xi32>
    %31 = arith.cmpi sge, %2, %30 : vector<1x256xi32>
    %c14_i32 = arith.constant 14 : i32
    %32 = vector.broadcast %c14_i32 : i32 to vector<1x256xi32>
    %33 = arith.cmpi sle, %18, %32 : vector<1x256xi32>
    %34 = arith.andi %31, %33 : vector<1x256xi1>
    %35 = arith.extui %34 : vector<1x256xi1> to vector<1x256xi32>
    %36 = arith.sitofp %35 : vector<1x256xi32> to vector<1x256xf32>
    %c1_i32_9 = arith.constant 1 : i32
    %37 = vector.broadcast %c1_i32_9 : i32 to vector<1x256xi32>
    %38 = arith.cmpi sge, %18, %37 : vector<1x256xi32>
    %39 = arith.extui %38 : vector<1x256xi1> to vector<1x256xi32>
    %40 = arith.sitofp %39 : vector<1x256xi32> to vector<1x256xf32>
    %c14_i32_10 = arith.constant 14 : i32
    %41 = vector.broadcast %c14_i32_10 : i32 to vector<1x256xi32>
    %42 = arith.cmpi sle, %18, %41 : vector<1x256xi32>
    %43 = arith.extui %42 : vector<1x256xi1> to vector<1x256xi32>
    %44 = arith.sitofp %43 : vector<1x256xi32> to vector<1x256xf32>
    %c240_i32 = arith.constant 240 : i32
    %45 = vector.broadcast %c240_i32 : i32 to vector<1x256xi32>
    %46 = arith.cmpi slt, %2, %45 : vector<1x256xi32>
    %c1_i32_11 = arith.constant 1 : i32
    %47 = vector.broadcast %c1_i32_11 : i32 to vector<1x256xi32>
    %48 = arith.cmpi sge, %18, %47 : vector<1x256xi32>
    %49 = arith.andi %46, %48 : vector<1x256xi1>
    %50 = arith.extui %49 : vector<1x256xi1> to vector<1x256xi32>
    %51 = arith.sitofp %50 : vector<1x256xi32> to vector<1x256xf32>
    %c240_i32_12 = arith.constant 240 : i32
    %52 = vector.broadcast %c240_i32_12 : i32 to vector<1x256xi32>
    %53 = arith.cmpi slt, %2, %52 : vector<1x256xi32>
    %54 = arith.extui %53 : vector<1x256xi1> to vector<1x256xi32>
    %55 = arith.sitofp %54 : vector<1x256xi32> to vector<1x256xf32>
    %c240_i32_13 = arith.constant 240 : i32
    %56 = vector.broadcast %c240_i32_13 : i32 to vector<1x256xi32>
    %57 = arith.cmpi slt, %2, %56 : vector<1x256xi32>
    %c14_i32_14 = arith.constant 14 : i32
    %58 = vector.broadcast %c14_i32_14 : i32 to vector<1x256xi32>
    %59 = arith.cmpi sle, %18, %58 : vector<1x256xi32>
    %60 = arith.andi %57, %59 : vector<1x256xi1>
    %61 = arith.extui %60 : vector<1x256xi1> to vector<1x256xi32>
    %62 = arith.sitofp %61 : vector<1x256xi32> to vector<1x256xf32>
    %c0_15 = arith.constant 0 : index
    %c0_16 = arith.constant 0 : index
    %63 = vector.load %arg2[%c0_15, %c0_16] : memref<8x36xf32, #tpu.memory_space<vmem>>, vector<8x36xf32>
    %c17_i32 = arith.constant 17 : i32
    %64 = tpu.dynamic_rotate %1 by %c17_i32 dim 1 : vector<4x256xf32>, i32 -> vector<4x256xf32>
    %65 = vector.broadcast %25 : vector<1x256xf32> to vector<4x256xf32>
    %66 = arith.mulf %64, %65 : vector<4x256xf32>
    %c16_i32_17 = arith.constant 16 : i32
    %67 = tpu.dynamic_rotate %1 by %c16_i32_17 dim 1 : vector<4x256xf32>, i32 -> vector<4x256xf32>
    %68 = vector.broadcast %29 : vector<1x256xf32> to vector<4x256xf32>
    %69 = arith.mulf %67, %68 : vector<4x256xf32>
    %c15_i32 = arith.constant 15 : i32
    %70 = tpu.dynamic_rotate %1 by %c15_i32 dim 1 : vector<4x256xf32>, i32 -> vector<4x256xf32>
    %71 = vector.broadcast %36 : vector<1x256xf32> to vector<4x256xf32>
    %72 = arith.mulf %70, %71 : vector<4x256xf32>
    %c1_i32_18 = arith.constant 1 : i32
    %73 = tpu.dynamic_rotate %1 by %c1_i32_18 dim 1 : vector<4x256xf32>, i32 -> vector<4x256xf32>
    %74 = vector.broadcast %40 : vector<1x256xf32> to vector<4x256xf32>
    %75 = arith.mulf %73, %74 : vector<4x256xf32>
    %c255_i32 = arith.constant 255 : i32
    %76 = tpu.dynamic_rotate %1 by %c255_i32 dim 1 : vector<4x256xf32>, i32 -> vector<4x256xf32>
    %77 = vector.broadcast %44 : vector<1x256xf32> to vector<4x256xf32>
    %78 = arith.mulf %76, %77 : vector<4x256xf32>
    %c241_i32 = arith.constant 241 : i32
    %79 = tpu.dynamic_rotate %1 by %c241_i32 dim 1 : vector<4x256xf32>, i32 -> vector<4x256xf32>
    %80 = vector.broadcast %51 : vector<1x256xf32> to vector<4x256xf32>
    %81 = arith.mulf %79, %80 : vector<4x256xf32>
    %c240_i32_19 = arith.constant 240 : i32
    %82 = tpu.dynamic_rotate %1 by %c240_i32_19 dim 1 : vector<4x256xf32>, i32 -> vector<4x256xf32>
    %83 = vector.broadcast %55 : vector<1x256xf32> to vector<4x256xf32>
    %84 = arith.mulf %82, %83 : vector<4x256xf32>
    %c239_i32 = arith.constant 239 : i32
    %85 = tpu.dynamic_rotate %1 by %c239_i32 dim 1 : vector<4x256xf32>, i32 -> vector<4x256xf32>
    %86 = vector.broadcast %62 : vector<1x256xf32> to vector<4x256xf32>
    %87 = arith.mulf %85, %86 : vector<4x256xf32>
    %88 = tpu.concatenate %66, %69, %72, %75, %1, %78, %81, %84, %87 in 0 : vector<4x256xf32>, vector<4x256xf32>, vector<4x256xf32>, vector<4x256xf32>, vector<4x256xf32>, vector<4x256xf32>, vector<4x256xf32>, vector<4x256xf32>, vector<4x256xf32> -> vector<36x256xf32>
    %cst = arith.constant dense<0.000000e+00> : vector<8x256xf32>
    %89 = tpu.matmul %63, %88, %cst {dimension_numbers = #tpu.dot_dimension_numbers<[1], [0], [0], [1], [0, 0, 1, 1], [], []>} : vector<8x36xf32>, vector<36x256xf32>, vector<8x256xf32> -> vector<8x256xf32>
    %c0_20 = arith.constant 0 : index
    %c0_21 = arith.constant 0 : index
    %90 = vector.load %arg3[%c0_20, %c0_21] : memref<8x1xf32, #tpu.memory_space<vmem>>, vector<8x1xf32>
    %91 = vector.broadcast %90 : vector<8x1xf32> to vector<8x256xf32>
    %92 = arith.mulf %89, %91 : vector<8x256xf32>
    %c0_22 = arith.constant 0 : index
    %c0_23 = arith.constant 0 : index
    %93 = vector.load %arg4[%c0_22, %c0_23] : memref<8x1xf32, #tpu.memory_space<vmem>>, vector<8x1xf32>
    %94 = vector.broadcast %93 : vector<8x1xf32> to vector<8x256xf32>
    %95 = arith.addf %92, %94 : vector<8x256xf32>
    %cst_24 = arith.constant 0.000000e+00 : f32
    %96 = vector.broadcast %cst_24 : f32 to vector<8x256xf32>
    %97 = arith.maximumf %95, %96 : vector<8x256xf32>
    %c0_25 = arith.constant 0 : index
    %c0_26 = arith.constant 0 : index
    %98 = vector.load %arg5[%c0_25, %c0_26] : memref<8x72xf32, #tpu.memory_space<vmem>>, vector<8x72xf32>
    %c17_i32_27 = arith.constant 17 : i32
    %99 = tpu.dynamic_rotate %97 by %c17_i32_27 dim 1 : vector<8x256xf32>, i32 -> vector<8x256xf32>
    %100 = vector.broadcast %25 : vector<1x256xf32> to vector<8x256xf32>
    %101 = arith.mulf %99, %100 : vector<8x256xf32>
    %c16_i32_28 = arith.constant 16 : i32
    %102 = tpu.dynamic_rotate %97 by %c16_i32_28 dim 1 : vector<8x256xf32>, i32 -> vector<8x256xf32>
    %103 = vector.broadcast %29 : vector<1x256xf32> to vector<8x256xf32>
    %104 = arith.mulf %102, %103 : vector<8x256xf32>
    %c15_i32_29 = arith.constant 15 : i32
    %105 = tpu.dynamic_rotate %97 by %c15_i32_29 dim 1 : vector<8x256xf32>, i32 -> vector<8x256xf32>
    %106 = vector.broadcast %36 : vector<1x256xf32> to vector<8x256xf32>
    %107 = arith.mulf %105, %106 : vector<8x256xf32>
    %c1_i32_30 = arith.constant 1 : i32
    %108 = tpu.dynamic_rotate %97 by %c1_i32_30 dim 1 : vector<8x256xf32>, i32 -> vector<8x256xf32>
    %109 = vector.broadcast %40 : vector<1x256xf32> to vector<8x256xf32>
    %110 = arith.mulf %108, %109 : vector<8x256xf32>
    %c255_i32_31 = arith.constant 255 : i32
    %111 = tpu.dynamic_rotate %97 by %c255_i32_31 dim 1 : vector<8x256xf32>, i32 -> vector<8x256xf32>
    %112 = vector.broadcast %44 : vector<1x256xf32> to vector<8x256xf32>
    %113 = arith.mulf %111, %112 : vector<8x256xf32>
    %c241_i32_32 = arith.constant 241 : i32
    %114 = tpu.dynamic_rotate %97 by %c241_i32_32 dim 1 : vector<8x256xf32>, i32 -> vector<8x256xf32>
    %115 = vector.broadcast %51 : vector<1x256xf32> to vector<8x256xf32>
    %116 = arith.mulf %114, %115 : vector<8x256xf32>
    %c240_i32_33 = arith.constant 240 : i32
    %117 = tpu.dynamic_rotate %97 by %c240_i32_33 dim 1 : vector<8x256xf32>, i32 -> vector<8x256xf32>
    %118 = vector.broadcast %55 : vector<1x256xf32> to vector<8x256xf32>
    %119 = arith.mulf %117, %118 : vector<8x256xf32>
    %c239_i32_34 = arith.constant 239 : i32
    %120 = tpu.dynamic_rotate %97 by %c239_i32_34 dim 1 : vector<8x256xf32>, i32 -> vector<8x256xf32>
    %121 = vector.broadcast %62 : vector<1x256xf32> to vector<8x256xf32>
    %122 = arith.mulf %120, %121 : vector<8x256xf32>
    %123 = tpu.concatenate %101, %104, %107, %110, %97, %113, %116, %119, %122 in 0 : vector<8x256xf32>, vector<8x256xf32>, vector<8x256xf32>, vector<8x256xf32>, vector<8x256xf32>, vector<8x256xf32>, vector<8x256xf32>, vector<8x256xf32>, vector<8x256xf32> -> vector<72x256xf32>
    %cst_35 = arith.constant dense<0.000000e+00> : vector<8x256xf32>
    %124 = tpu.matmul %98, %123, %cst_35 {dimension_numbers = #tpu.dot_dimension_numbers<[1], [0], [0], [1], [0, 0, 1, 1], [], []>} : vector<8x72xf32>, vector<72x256xf32>, vector<8x256xf32> -> vector<8x256xf32>
    %c0_36 = arith.constant 0 : index
    %c0_37 = arith.constant 0 : index
    %125 = vector.load %arg8[%c0_36, %c0_37] : memref<8x4xf32, #tpu.memory_space<vmem>>, vector<8x4xf32>
    %cst_38 = arith.constant dense<0.000000e+00> : vector<8x256xf32>
    %126 = tpu.matmul %125, %1, %cst_38 {dimension_numbers = #tpu.dot_dimension_numbers<[1], [0], [0], [1], [0, 0, 1, 1], [], []>} : vector<8x4xf32>, vector<4x256xf32>, vector<8x256xf32> -> vector<8x256xf32>
    %c0_39 = arith.constant 0 : index
    %c0_40 = arith.constant 0 : index
    %127 = vector.load %arg6[%c0_39, %c0_40] : memref<8x1xf32, #tpu.memory_space<vmem>>, vector<8x1xf32>
    %128 = vector.broadcast %127 : vector<8x1xf32> to vector<8x256xf32>
    %129 = arith.mulf %124, %128 : vector<8x256xf32>
    %130 = arith.addf %129, %126 : vector<8x256xf32>
    %c0_41 = arith.constant 0 : index
    %c0_42 = arith.constant 0 : index
    %131 = vector.load %arg7[%c0_41, %c0_42] : memref<8x1xf32, #tpu.memory_space<vmem>>, vector<8x1xf32>
    %132 = vector.broadcast %131 : vector<8x1xf32> to vector<8x256xf32>
    %133 = arith.addf %130, %132 : vector<8x256xf32>
    %cst_43 = arith.constant 0.000000e+00 : f32
    %134 = vector.broadcast %cst_43 : f32 to vector<8x256xf32>
    %135 = arith.maximumf %133, %134 : vector<8x256xf32>
    %c0_44 = arith.constant 0 : index
    %c0_45 = arith.constant 0 : index
    %c0_46 = arith.constant 0 : index
    %136 = vector.load %arg9[%c0_44, %c0_45, %c0_46] : memref<1x8x256xf32, #tpu.memory_space<vmem>>, vector<1x8x256xf32>
    %137 = vector.shape_cast %136 : vector<1x8x256xf32> to vector<8x256xf32>
    %138 = vector.shape_cast %135 : vector<8x256xf32> to vector<1x8x256xf32>
    tpu.vector_store %arg9[%c0_44, %c0_45, %c0_46], %138 {strides = array<i32>} : memref<1x8x256xf32, #tpu.memory_space<vmem>>, vector<1x8x256xf32>,
    return
  }
  func.func @transform_0(%arg0: i32) -> (i32, i32, i32) {
    %c0_i32 = arith.constant 0 : i32
    %c0_i32_0 = arith.constant 0 : i32
    %c0_i32_1 = arith.constant 0 : i32
    return %arg0, %c0_i32, %c0_i32_0 : i32, i32, i32
  }
  func.func @transform_1(%arg0: i32) -> (i32, i32) {
    %c0_i32 = arith.constant 0 : i32
    %c0_i32_0 = arith.constant 0 : i32
    %c0_i32_1 = arith.constant 0 : i32
    return %c0_i32, %c0_i32_0 : i32, i32
  }
  func.func @transform_2(%arg0: i32) -> (i32, i32) {
    %c0_i32 = arith.constant 0 : i32
    %c0_i32_0 = arith.constant 0 : i32
    %c0_i32_1 = arith.constant 0 : i32
    return %c0_i32, %c0_i32_0 : i32, i32
  }
  func.func @transform_3(%arg0: i32) -> (i32, i32) {
    %c0_i32 = arith.constant 0 : i32
    %c0_i32_0 = arith.constant 0 : i32
    %c0_i32_1 = arith.constant 0 : i32
    return %c0_i32, %c0_i32_0 : i32, i32
  }
  func.func @transform_4(%arg0: i32) -> (i32, i32) {
    %c0_i32 = arith.constant 0 : i32
    %c0_i32_0 = arith.constant 0 : i32
    %c0_i32_1 = arith.constant 0 : i32
    return %c0_i32, %c0_i32_0 : i32, i32
  }
  func.func @transform_5(%arg0: i32) -> (i32, i32) {
    %c0_i32 = arith.constant 0 : i32
    %c0_i32_0 = arith.constant 0 : i32
    %c0_i32_1 = arith.constant 0 : i32
    return %c0_i32, %c0_i32_0 : i32, i32
  }
  func.func @transform_6(%arg0: i32) -> (i32, i32) {
    %c0_i32 = arith.constant 0 : i32
    %c0_i32_0 = arith.constant 0 : i32
    %c0_i32_1 = arith.constant 0 : i32
    return %c0_i32, %c0_i32_0 : i32, i32
  }
  func.func @transform_7(%arg0: i32) -> (i32, i32) {
    %c0_i32 = arith.constant 0 : i32
    %c0_i32_0 = arith.constant 0 : i32
    %c0_i32_1 = arith.constant 0 : i32
    return %c0_i32, %c0_i32_0 : i32, i32
  }
  func.func @transform_8(%arg0: i32) -> (i32, i32, i32) {
    %c0_i32 = arith.constant 0 : i32
    %c0_i32_0 = arith.constant 0 : i32
    %c0_i32_1 = arith.constant 0 : i32
    return %arg0, %c0_i32, %c0_i32_0 : i32, i32, i32
  }
}

</mosaic_0001>

<llo_original>
// kernel: tpu_custom_call.1
$region0: #{tpu_custom_call.1}
  #allocation0 [shape = 'u32[]', space=smem, size = 0x4, offset = 0x4, fixed_abs, tag = 'smem constant byte address 0x4 - core index']
  #allocation1 [shape = 'u32[144,128]{1,0:T(1,128)}', space=vmem, size = 0x12000, scoped, tag = 'internal scratch']
  %s0 = inlined_call_operand.vmem [shape: f32[2,4,256], index: 0, kind: input, shape index: {}]
  %s1 = inlined_call_operand.vmem [shape: f32[8,36], index: 1, kind: input, shape index: {}]
  %s2 = inlined_call_operand.vmem [shape: f32[8,1], index: 2, kind: input, shape index: {}]
  %s3 = inlined_call_operand.vmem [shape: f32[8,1], index: 3, kind: input, shape index: {}]
  %s4 = inlined_call_operand.vmem [shape: f32[8,72], index: 4, kind: input, shape index: {}]
  %s5 = inlined_call_operand.vmem [shape: f32[8,1], index: 5, kind: input, shape index: {}]
  %s6 = inlined_call_operand.vmem [shape: f32[8,1], index: 6, kind: input, shape index: {}]
  %s7 = inlined_call_operand.vmem [shape: f32[8,4], index: 7, kind: input, shape index: {}]
  %s8 = inlined_call_operand.hbm [shape: f32[2,8,256], index: 8, kind: output, shape index: {}]
  %s9 = sld [smem:[#allocation0]]
  $region65: #{tpu_custom_call.1} parent=0
    _
  %s11 = ssub.s32 1, %s9
  %s12 = scalar_select 0, %s11, %s9
  $region1: #{tpu_custom_call.1} parent=0
    #allocation2 [shape = 'u8[16384]{0}', space=vmem, size = 0x4000, scoped, tag = 'output window, operand 0']
    #allocation3 [shape = 's32[2]{0}', space=sflag, size = 0x8, scoped, tag = 'scoped memory for tpu_custom_call.1']
    %13 = vsyncpa [#allocation3], 0
    %s14 = scalar_lea.sflag [#allocation3], 1
    %15 = vsyncpa %s14, 0
    loop: start=0, step=1, limit=4
    $region2: #{tpu_custom_call.1} parent=1 // loop_pre_header
      _
    $region3: #{tpu_custom_call.1} parent=1 // loop_header
      %s17 = sphi 0, %s21
      %p18 = scmp.ge.s32.totalorder %s17, 4
      %s27 = sphi 0, %s29
      %s30 = sphi 0, %s27
      %s31 = sphi 0, %s30
      %s47 = sphi 0, %s31
      %s51 = sphi 0, %s51
      %s53 = sphi 0, %s51
      %s54 = sphi 0, %s53
      %s68 = sphi 0, %s54
      %s72 = sphi 0, %s72
      %s74 = sphi 0, %s72
      %s75 = sphi 0, %s74
      %s89 = sphi 0, %s75
      %s93 = sphi 0, %s93
      %s95 = sphi 0, %s93
      %s96 = sphi 0, %s95
      %s110 = sphi 0, %s96
      %s114 = sphi 0, %s114
      %s116 = sphi 0, %s114
      %s117 = sphi 0, %s116
      %s131 = sphi 0, %s117
      %s135 = sphi 0, %s135
      %s137 = sphi 0, %s135
      %s138 = sphi 0, %s137
      %s152 = sphi 0, %s138
      %s156 = sphi 0, %s156
      %s158 = sphi 0, %s156
      %s159 = sphi 0, %s158
      %s173 = sphi 0, %s159
      %s177 = sphi 0, %s177
      %s179 = sphi 0, %s177
      %s180 = sphi 0, %s179
      %s194 = sphi 0, %s180
      %s200 = sphi 0, %s202
      %s203 = sphi 0, %s200
      %s204 = sphi 0, %s203
      %s220 = sphi 0, %s204
    $region4: #{tpu_custom_call.1} parent=1 // loop_header_branch
      %20 = sbr.rel (%p18) target = $region8
    $region5: #{tpu_custom_call.1} parent=1 // loop_body
      %s22 = ssub.s32 %s17, 1
      %s23 = ssub.s32 %s17, 2
      %s24 = sadd.s32 %s17, 1
      %s25 = ssub.s32 %s17, %s24
      %p26 = scmp.eq.s32.totalorder %s25, 0
      %s28 = sadd.s32 %s27, 1
      %s29 = scalar_select %p26, %s27, %s28
      %p32 = pneg %p26
      %p33 = scmp.eq.s32.totalorder %s17, 1
      %p34 = por %p32, %p33
      %p35 = scmp.ne.s32.totalorder %s27, %s30
      %p36 = scmp.eq.s32.totalorder %s17, 0
      %p37 = por %p35, %p36
      %p38 = scmp.ne.s32.totalorder %s27, %s30
      %p39 = scmp.eq.s32.totalorder %s22, 1
      %p40 = por %p38, %p39
      %p41 = scmp.ne.s32.totalorder %s30, %s31
      %p42 = scmp.eq.s32.totalorder %s22, 0
      %p43 = por %p41, %p42
      %p44 = scmp.ne.s32.totalorder %s30, %s31
      %p45 = scmp.eq.s32.totalorder %s23, 1
      %p46 = por %p44, %p45
      %p48 = scmp.ne.s32.totalorder %s31, %s47
      %p49 = scmp.eq.s32.totalorder %s23, 0
      %p50 = por %p48, %p49
      %s52 = sadd.s32 %s51, 1
      %p55 = scmp.eq.s32.totalorder %s17, 1
      %p56 = scmp.ne.s32.totalorder %s51, %s53
      %p57 = scmp.eq.s32.totalorder %s17, 0
      %p58 = por %p56, %p57
      %p59 = scmp.ne.s32.totalorder %s51, %s53
      %p60 = scmp.eq.s32.totalorder %s22, 1
      %p61 = por %p59, %p60
      %p62 = scmp.ne.s32.totalorder %s53, %s54
      %p63 = scmp.eq.s32.totalorder %s22, 0
      %p64 = por %p62, %p63
      %p65 = scmp.ne.s32.totalorder %s53, %s54
      %p66 = scmp.eq.s32.totalorder %s23, 1
      %p67 = por %p65, %p66
      %p69 = scmp.ne.s32.totalorder %s54, %s68
      %p70 = scmp.eq.s32.totalorder %s23, 0
      %p71 = por %p69, %p70
      %s73 = sadd.s32 %s72, 1
      %p76 = scmp.eq.s32.totalorder %s17, 1
      %p77 = scmp.ne.s32.totalorder %s72, %s74
      %p78 = scmp.eq.s32.totalorder %s17, 0
      %p79 = por %p77, %p78
      %p80 = scmp.ne.s32.totalorder %s72, %s74
      %p81 = scmp.eq.s32.totalorder %s22, 1
      %p82 = por %p80, %p81
      %p83 = scmp.ne.s32.totalorder %s74, %s75
      %p84 = scmp.eq.s32.totalorder %s22, 0
      %p85 = por %p83, %p84
      %p86 = scmp.ne.s32.totalorder %s74, %s75
      %p87 = scmp.eq.s32.totalorder %s23, 1
      %p88 = por %p86, %p87
      %p90 = scmp.ne.s32.totalorder %s75, %s89
      %p91 = scmp.eq.s32.totalorder %s23, 0
      %p92 = por %p90, %p91
      %s94 = sadd.s32 %s93, 1
      %p97 = scmp.eq.s32.totalorder %s17, 1
      %p98 = scmp.ne.s32.totalorder %s93, %s95
      %p99 = scmp.eq.s32.totalorder %s17, 0
      %p100 = por %p98, %p99
      %p101 = scmp.ne.s32.totalorder %s93, %s95
      %p102 = scmp.eq.s32.totalorder %s22, 1
      %p103 = por %p101, %p102
      %p104 = scmp.ne.s32.totalorder %s95, %s96
      %p105 = scmp.eq.s32.totalorder %s22, 0
      %p106 = por %p104, %p105
      %p107 = scmp.ne.s32.totalorder %s95, %s96
      %p108 = scmp.eq.s32.totalorder %s23, 1
      %p109 = por %p107, %p108
      %p111 = scmp.ne.s32.totalorder %s96, %s110
      %p112 = scmp.eq.s32.totalorder %s23, 0
      %p113 = por %p111, %p112
      %s115 = sadd.s32 %s114, 1
      %p118 = scmp.eq.s32.totalorder %s17, 1
      %p119 = scmp.ne.s32.totalorder %s114, %s116
      %p120 = scmp.eq.s32.totalorder %s17, 0
      %p121 = por %p119, %p120
      %p122 = scmp.ne.s32.totalorder %s114, %s116
      %p123 = scmp.eq.s32.totalorder %s22, 1
      %p124 = por %p122, %p123
      %p125 = scmp.ne.s32.totalorder %s116, %s117
      %p126 = scmp.eq.s32.totalorder %s22, 0
      %p127 = por %p125, %p126
      %p128 = scmp.ne.s32.totalorder %s116, %s117
      %p129 = scmp.eq.s32.totalorder %s23, 1
      %p130 = por %p128, %p129
      %p132 = scmp.ne.s32.totalorder %s117, %s131
      %p133 = scmp.eq.s32.totalorder %s23, 0
      %p134 = por %p132, %p133
      %s136 = sadd.s32 %s135, 1
      %p139 = scmp.eq.s32.totalorder %s17, 1
      %p140 = scmp.ne.s32.totalorder %s135, %s137
      %p141 = scmp.eq.s32.totalorder %s17, 0
      %p142 = por %p140, %p141
      %p143 = scmp.ne.s32.totalorder %s135, %s137
      %p144 = scmp.eq.s32.totalorder %s22, 1
      %p145 = por %p143, %p144
      %p146 = scmp.ne.s32.totalorder %s137, %s138
      %p147 = scmp.eq.s32.totalorder %s22, 0
      %p148 = por %p146, %p147
      %p149 = scmp.ne.s32.totalorder %s137, %s138
      %p150 = scmp.eq.s32.totalorder %s23, 1
      %p151 = por %p149, %p150
      %p153 = scmp.ne.s32.totalorder %s138, %s152
      %p154 = scmp.eq.s32.totalorder %s23, 0
      %p155 = por %p153, %p154
      %s157 = sadd.s32 %s156, 1
      %p160 = scmp.eq.s32.totalorder %s17, 1
      %p161 = scmp.ne.s32.totalorder %s156, %s158
      %p162 = scmp.eq.s32.totalorder %s17, 0
      %p163 = por %p161, %p162
      %p164 = scmp.ne.s32.totalorder %s156, %s158
      %p165 = scmp.eq.s32.totalorder %s22, 1
      %p166 = por %p164, %p165
      %p167 = scmp.ne.s32.totalorder %s158, %s159
      %p168 = scmp.eq.s32.totalorder %s22, 0
      %p169 = por %p167, %p168
      %p170 = scmp.ne.s32.totalorder %s158, %s159
      %p171 = scmp.eq.s32.totalorder %s23, 1
      %p172 = por %p170, %p171
      %p174 = scmp.ne.s32.totalorder %s159, %s173
      %p175 = scmp.eq.s32.totalorder %s23, 0
      %p176 = por %p174, %p175
      %s178 = sadd.s32 %s177, 1
      %p181 = scmp.eq.s32.totalorder %s17, 1
      %p182 = scmp.ne.s32.totalorder %s177, %s179
      %p183 = scmp.eq.s32.totalorder %s17, 0
      %p184 = por %p182, %p183
      %p185 = scmp.ne.s32.totalorder %s177, %s179
      %p186 = scmp.eq.s32.totalorder %s22, 1
      %p187 = por %p185, %p186
      %p188 = scmp.ne.s32.totalorder %s179, %s180
      %p189 = scmp.eq.s32.totalorder %s22, 0
      %p190 = por %p188, %p189
      %p191 = scmp.ne.s32.totalorder %s179, %s180
      %p192 = scmp.eq.s32.totalorder %s23, 1
      %p193 = por %p191, %p192
      %p195 = scmp.ne.s32.totalorder %s180, %s194
      %p196 = scmp.eq.s32.totalorder %s23, 0
      %p197 = por %p195, %p196
      %s198 = ssub.s32 %s17, %s24
      %p199 = scmp.eq.s32.totalorder %s198, 0
      %s201 = sadd.s32 %s200, 1
      %s202 = scalar_select %p199, %s200, %s201
      %p205 = pneg %p199
      %p206 = scmp.eq.s32.totalorder %s17, 1
      %p207 = por %p205, %p206
      %p208 = scmp.ne.s32.totalorder %s200, %s203
      %p209 = scmp.eq.s32.totalorder %s17, 0
      %p210 = por %p208, %p209
      %p211 = scmp.ne.s32.totalorder %s200, %s203
      %p212 = scmp.eq.s32.totalorder %s22, 1
      %p213 = por %p211, %p212
      %p214 = scmp.ne.s32.totalorder %s203, %s204
      %p215 = scmp.eq.s32.totalorder %s22, 0
      %p216 = por %p214, %p215
      %p217 = scmp.ne.s32.totalorder %s203, %s204
      %p218 = scmp.eq.s32.totalorder %s23, 1
      %p219 = por %p217, %p218
      %p221 = scmp.ne.s32.totalorder %s204, %s220
      %p222 = scmp.eq.s32.totalorder %s23, 0
      %p223 = por %p221, %p222
      %p224 = scmp.le.s32.totalorder 1, %s17
      %p225 = scmp.lt.s32.totalorder %s17, 3
      %p226 = pnand %p224, %p225
      %p227 = pneg %p226
      // Predicated region
      $region9: #{tpu_custom_call.1} parent=5 // pred_check
        _
      $region10: #{tpu_custom_call.1} parent=5 // pred_check_branch
        %229 = sbr.rel (%p226) target = $region12
      $region11: #{tpu_custom_call.1} parent=5 // pred_region
        %s230 = ssub.s32 %s17, 1
        // Predicated region
        $region13: #{tpu_custom_call.1} parent=11 // pred_check
          %p231 = pneg %p64
        $region14: #{tpu_custom_call.1} parent=11 // pred_check_branch
          %233 = sbr.rel (%p231) target = $region16
        $region15: #{tpu_custom_call.1} parent=11 // pred_region
          _
        $region16: #{tpu_custom_call.1} parent=11 // pred_fallthru
          _
        // Predicated region
        $region17: #{tpu_custom_call.1} parent=11 // pred_check
          %p234 = pneg %p85
        $region18: #{tpu_custom_call.1} parent=11 // pred_check_branch
          %236 = sbr.rel (%p234) target = $region20
        $region19: #{tpu_custom_call.1} parent=11 // pred_region
          _
        $region20: #{tpu_custom_call.1} parent=11 // pred_fallthru
          _
        // Predicated region
        $region21: #{tpu_custom_call.1} parent=11 // pred_check
          %p237 = pneg %p106
        $region22: #{tpu_custom_call.1} parent=11 // pred_check_branch
          %239 = sbr.rel (%p237) target = $region24
        $region23: #{tpu_custom_call.1} parent=11 // pred_region
          _
        $region24: #{tpu_custom_call.1} parent=11 // pred_fallthru
          _
        // Predicated region
        $region25: #{tpu_custom_call.1} parent=11 // pred_check
          %p240 = pneg %p127
        $region26: #{tpu_custom_call.1} parent=11 // pred_check_branch
          %242 = sbr.rel (%p240) target = $region28
        $region27: #{tpu_custom_call.1} parent=11 // pred_region
          _
        $region28: #{tpu_custom_call.1} parent=11 // pred_fallthru
          _
        // Predicated region
        $region29: #{tpu_custom_call.1} parent=11 // pred_check
          %p243 = pneg %p148
        $region30: #{tpu_custom_call.1} parent=11 // pred_check_branch
          %245 = sbr.rel (%p243) target = $region32
        $region31: #{tpu_custom_call.1} parent=11 // pred_region
          _
        $region32: #{tpu_custom_call.1} parent=11 // pred_fallthru
          _
        // Predicated region
        $region33: #{tpu_custom_call.1} parent=11 // pred_check
          %p246 = pneg %p169
        $region34: #{tpu_custom_call.1} parent=11 // pred_check_branch
          %248 = sbr.rel (%p246) target = $region36
        $region35: #{tpu_custom_call.1} parent=11 // pred_region
          _
        $region36: #{tpu_custom_call.1} parent=11 // pred_fallthru
          _
        // Predicated region
        $region37: #{tpu_custom_call.1} parent=11 // pred_check
          %p249 = pneg %p190
        $region38: #{tpu_custom_call.1} parent=11 // pred_check_branch
          %251 = sbr.rel (%p249) target = $region40
        $region39: #{tpu_custom_call.1} parent=11 // pred_region
          _
        $region40: #{tpu_custom_call.1} parent=11 // pred_fallthru
          _
      $region12: #{tpu_custom_call.1} parent=5 // pred_fallthru
        _
      %p252 = scmp.lt.s32.totalorder %s17, 2
      // Predicated region
      $region41: #{tpu_custom_call.1} parent=5 // pred_check
        %p253 = pneg %p252
      $region42: #{tpu_custom_call.1} parent=5 // pred_check_branch
        %255 = sbr.rel (%p253) target = $region44
      $region43: #{tpu_custom_call.1} parent=5 // pred_region
        // Predicated region
        $region45: #{tpu_custom_call.1} parent=43 // pred_check
          %p256 = pneg %p37
        $region46: #{tpu_custom_call.1} parent=43 // pred_check_branch
          %258 = sbr.rel (%p256) target = $region48
        $region47: #{tpu_custom_call.1} parent=43 // pred_region
          %p259 = scmp.lt.s32.totalorder %s17, 1
          %s260 = scalar_select %p259, %s17, 1
          %s261 = smul.addr %s260, 2
          %s262 = smul.addr %s261, 4
          %s263 = scalar_lea.vmem %s0, %s262
        $region48: #{tpu_custom_call.1} parent=43 // pred_fallthru
          _
      $region44: #{tpu_custom_call.1} parent=5 // pred_fallthru
        _
      %p264 = scmp.le.s32.totalorder 1, %s17
      %p265 = scmp.lt.s32.totalorder %s17, 3
      %p266 = pnand %p264, %p265
      %p267 = pneg %p266
      // Predicated region
      $region49: #{tpu_custom_call.1} parent=5 // pred_check
        _
      $region50: #{tpu_custom_call.1} parent=5 // pred_check_branch
        %269 = sbr.rel (%p266) target = $region52
      $region51: #{tpu_custom_call.1} parent=5 // pred_region
        %s270 = ssub.s32 %s17, 1
        %p271 = scmp.lt.s32.totalorder %s22, 1
        %s272 = scalar_select %p271, %s22, 1
        %s273 = smul.addr %s272, 2
        %s274 = smul.addr %s273, 4
        %s275 = scalar_lea.vmem %s0, %s274
        %p276 = pneg %p43
        %p277 = pneg %p40
        %p278 = pneg %p64
        %p279 = pneg %p61
        %p280 = pneg %p85
        %p281 = pneg %p82
        %p282 = pneg %p106
        %p283 = pneg %p103
        %p284 = pneg %p127
        %p285 = pneg %p124
        %p286 = pneg %p148
        %p287 = pneg %p145
        %p288 = pneg %p169
        %p289 = pneg %p166
        %p290 = pneg %p190
        %p291 = pneg %p187
        %p292 = pneg %p216
        %p293 = pneg %p213
        %s294 = sand.u32 %s203, 1
        %s295 = scalar_lea.sflag [#allocation3], %s294
        %s296 = sand.u32 %s203, 1
        %s297 = smul.addr %s296, 16
        %s298 = scalar_lea.vmem [#allocation2], %s297
        %p299 = scmp.lt.s32.totalorder %s22, 1
        %s300 = scalar_select %p299, %s22, 1
        %s301 = smul.addr %s300, 2
        %s302 = smul.addr %s301, 4
        %s303 = scalar_lea.vmem %s0, %s302
        %v304 = vld [vmem:[%s303] sm:$0xff]
        %v305 = vlaneseq
        %v306 = vand.u32 %v305, 127
        %v307 = vadd.s32 %v306, 128
        %vm308 = vcmp.lt.s32.totalorder %v306, 0
        %v309 = vsub.s32 0, %v306
        %v310 = vsel %vm308, %v309, %v306
        %v311 = vshrl.u32 %v310, 4
        %v312 = vand.u32 %v310, 15
        %v313 = vsub.s32 0, %v312
        %v314 = vsel %vm308, %v313, %v312
        %vm315 = vcmp.lt.s32.totalorder %v307, 0
        %v316 = vsub.s32 0, %v307
        %v317 = vsel %vm315, %v316, %v307
        %v318 = vshrl.u32 %v317, 4
        %v319 = vand.u32 %v317, 15
        %v320 = vsub.s32 0, %v319
        %v321 = vsel %vm315, %v320, %v319
        %vm322 = vcmp.ne.s32.totalorder %v314, 0
        %vm323 = vcmp.ne.s32.totalorder %v321, 0
        %vm324 = vcmp.lt.s32.totalorder %v314, 0
        %vm325 = vcmp.lt.s32.totalorder %v321, 0
        %vm326 = vmand %vm324, %vm322
        %vm327 = vmand %vm325, %vm323
        %v328 = vadd.s32 %v314, 16
        %v329 = vadd.s32 %v321, 16
        %v330 = vsel %vm326, %v328, %v314
        %v331 = vsel %vm327, %v329, %v321
        %vm332 = vcmp.ge.s32.totalorder %v306, 16
        %vm333 = vcmp.ge.s32.totalorder %v307, 16
        %vm334 = vcmp.ge.s32.totalorder %v330, 1
        %vm335 = vcmp.ge.s32.totalorder %v331, 1
        %vm336 = vmand %vm332, %vm334
        %vm337 = vmand %vm333, %vm335
        %v338 = vsel %vm336, 1, 0
        %v339 = vsel %vm337, 1, 0
        %v340 = vcvt.s32.f32 %v338
        %v341 = vcvt.s32.f32 %v339
        %v342 = vsel %vm332, 1, 0
        %v343 = vsel %vm333, 1, 0
        %v344 = vcvt.s32.f32 %v342
        %v345 = vcvt.s32.f32 %v343
        %vm346 = vcmp.le.s32.totalorder %v330, 14
        %vm347 = vcmp.le.s32.totalorder %v331, 14
        %vm348 = vmand %vm332, %vm346
        %vm349 = vmand %vm333, %vm347
        %v350 = vsel %vm348, 1, 0
        %v351 = vsel %vm349, 1, 0
        %v352 = vcvt.s32.f32 %v350
        %v353 = vcvt.s32.f32 %v351
        %v354 = vsel %vm334, 1, 0
        %v355 = vsel %vm335, 1, 0
        %v356 = vcvt.s32.f32 %v354
        %v357 = vcvt.s32.f32 %v355
        %v358 = vsel %vm346, 1, 0
        %v359 = vsel %vm347, 1, 0
        %v360 = vcvt.s32.f32 %v358
        %v361 = vcvt.s32.f32 %v359
        %vm362 = vcmp.lt.s32.totalorder %v306, 240
        %vm363 = vcmp.lt.s32.totalorder %v307, 240
        %vm364 = vmand %vm362, %vm334
        %vm365 = vmand %vm363, %vm335
        %v366 = vsel %vm364, 1, 0
        %v367 = vsel %vm365, 1, 0
        %v368 = vcvt.s32.f32 %v366
        %v369 = vcvt.s32.f32 %v367
        %v370 = vsel %vm362, 1, 0
        %v371 = vsel %vm363, 1, 0
        %v372 = vcvt.s32.f32 %v370
        %v373 = vcvt.s32.f32 %v371
        %vm374 = vmand %vm362, %vm346
        %vm375 = vmand %vm363, %vm347
        %v376 = vsel %vm374, 1, 0
        %v377 = vsel %vm375, 1, 0
        %v378 = vcvt.s32.f32 %v376
        %v379 = vcvt.s32.f32 %v377
        %v380 = vld [vmem:[%s1] sm:$0xff]
        %v382 = vcombine.high %v304, %v304
        %384 = vrot.lane.b32.xlu0 %v304, 17
        %v385 = vpop.permute.xlu0 %384
        %386 = vrot.lane.b32.xlu0 %v382, 17
        %v387 = vpop.permute.xlu0 %386
        %vm388 = vcmp.lt.s32.totalorder %v306, 17
        %v389 = vsel %vm388, %v385, %v387
        %v390 = vsel %vm388, %v387, %v385
        %v391 = vmul.f32 %v390, %v340
        %v392 = vmul.f32 %v389, %v341
        %393 = vrot.lane.b32.xlu0 %v304, 16
        %v394 = vpop.permute.xlu0 %393
        %395 = vrot.lane.b32.xlu0 %v382, 16
        %v396 = vpop.permute.xlu0 %395
        %vm397 = vcmp.lt.s32.totalorder %v306, 16
        %v398 = vsel %vm397, %v394, %v396
        %v399 = vsel %vm397, %v396, %v394
        %v400 = vmul.f32 %v399, %v344
        %v401 = vmul.f32 %v398, %v345
        %402 = vrot.lane.b32.xlu0 %v304, 15
        %v403 = vpop.permute.xlu0 %402
        %404 = vrot.lane.b32.xlu0 %v382, 15
        %v405 = vpop.permute.xlu0 %404
        %vm406 = vcmp.lt.s32.totalorder %v306, 15
        %v407 = vsel %vm406, %v403, %v405
        %v408 = vsel %vm406, %v405, %v403
        %v409 = vmul.f32 %v408, %v352
        %v410 = vmul.f32 %v407, %v353
        %411 = vrot.lane.b32.xlu0 %v304, 1
        %v412 = vpop.permute.xlu0 %411
        %413 = vrot.lane.b32.xlu0 %v382, 1
        %v414 = vpop.permute.xlu0 %413
        %vm415 = vcmp.lt.s32.totalorder %v306, 1
        %v416 = vsel %vm415, %v412, %v414
        %v417 = vsel %vm415, %v414, %v412
        %v418 = vmul.f32 %v417, %v356
        %v419 = vmul.f32 %v416, %v357
        %420 = vrot.lane.b32.xlu0 %v304, 127
        %v421 = vpop.permute.xlu0 %420
        %422 = vrot.lane.b32.xlu0 %v382, 127
        %v423 = vpop.permute.xlu0 %422
        %vm424 = vcmp.lt.s32.totalorder %v306, 127
        %v425 = vsel %vm424, %v421, %v423
        %v426 = vsel %vm424, %v423, %v421
        %v427 = vmul.f32 %v425, %v360
        %v428 = vmul.f32 %v426, %v361
        %429 = vrot.lane.b32.xlu0 %v304, 113
        %v430 = vpop.permute.xlu0 %429
        %431 = vrot.lane.b32.xlu0 %v382, 113
        %v432 = vpop.permute.xlu0 %431
        %vm433 = vcmp.lt.s32.totalorder %v306, 113
        %v434 = vsel %vm433, %v430, %v432
        %v435 = vsel %vm433, %v432, %v430
        %v436 = vmul.f32 %v434, %v368
        %v437 = vmul.f32 %v435, %v369
        %438 = vrot.lane.b32.xlu0 %v304, 112
        %v439 = vpop.permute.xlu0 %438
        %440 = vrot.lane.b32.xlu0 %v382, 112
        %v441 = vpop.permute.xlu0 %440
        %vm442 = vcmp.lt.s32.totalorder %v306, 112
        %v443 = vsel %vm442, %v439, %v441
        %v444 = vsel %vm442, %v441, %v439
        %v445 = vmul.f32 %v443, %v372
        %v446 = vmul.f32 %v444, %v373
        %447 = vrot.lane.b32.xlu0 %v304, 111
        %v448 = vpop.permute.xlu0 %447
        %449 = vrot.lane.b32.xlu0 %v382, 111
        %v450 = vpop.permute.xlu0 %449
        %vm451 = vcmp.lt.s32.totalorder %v306, 111
        %v452 = vsel %vm451, %v448, %v450
        %v453 = vsel %vm451, %v450, %v448
        %v454 = vmul.f32 %v452, %v378
        %v455 = vmul.f32 %v453, %v379
        %v458 = vrot.slane %v400, 4
        %v459 = vrot.slane %v401, 4
        %v464 = vrot.slane %v418, 4
        %v465 = vrot.slane %v419, 4
        %v470 = vrot.slane %v427, 4
        %v471 = vrot.slane %v428, 4
        %v476 = vrot.slane %v445, 4
        %v477 = vrot.slane %v446, 4
        %vm480 = vcmask 1043456
        %v481 = vsel %vm480, %v391, %v458
        %v482 = vsel %vm480, %v392, %v459
        %v483 = vsel %vm480, %v409, %v464
        %v484 = vsel %vm480, %v410, %v465
        %v485 = vsel %vm480, %v304, %v470
        %v486 = vsel %vm480, %v382, %v471
        %v487 = vsel %vm480, %v436, %v476
        %v488 = vsel %vm480, %v437, %v477
        %vm489 = vcmask 293888
        %v491 = vsel %vm489, %v380, 0
        %v494 = vsel %vm480, %v454, 0
        %v497 = vsel %vm480, %v455, 0
        %499 = vmatprep.subr.mxu0 %v482
        %500 = vmatpush1.msra.mxu0 %v481
        %501 = vmatprep.subr.mxu0 %v484
        %502 = vmatpush1.msra.mxu0 %v483
        %503 = vmatprep.subr.mxu0 %v486
        %504 = vmatpush1.msra.mxu0 %v485
        %505 = vmatprep.subr.mxu0 %v488
        %506 = vmatpush1.msra.mxu0 %v487
        %507 = vmatprep.subr.mxu0 %v497
        %508 = vmatpush1.msra.mxu0 %v494
        %509 = vmatprep.subr.mxu0 0.0
        %510 = vmatpush1.msra.mxu0 0.0
        %511 = vmatprep.subr.mxu0 0.0
        %512 = vmatpush1.msra.mxu0 0.0
        %513 = vmatprep.subr.mxu0 0.0
        %514 = vmatpush1.msra.mxu0 0.0
        %515 = vmatprep.subr.mxu0 0.0
        %516 = vmatpush1.msra.mxu0 0.0
        %517 = vmatprep.subr.mxu0 0.0
        %518 = vmatpush1.msra.mxu0 0.0
        %519 = vmatprep.subr.mxu0 0.0
        %520 = vmatpush1.msra.mxu0 0.0
        %521 = vmatprep.subr.mxu0 0.0
        %522 = vmatpush1.msra.mxu0 0.0
        %523 = vmatprep.subr.mxu0 0.0
        %524 = vmatpush1.msra.mxu0 0.0
        %525 = vmatprep.subr.mxu0 0.0
        %526 = vmatpush1.msra.mxu0 0.0
        %527 = vmatprep.subr.mxu0 0.0
        %528 = vmatpush1.msra.mxu0 0.0
        %529 = vmatprep.subr.mxu0 0.0
        %530 = vmatpush1.msra.mxu0 0.0
        %531 = vmatprep.subr.mxu0 0.0
        %532 = vmatpush1.msra.mxu0 0.0
        %533 = vmatprep.subr.mxu0 0.0
        %534 = vmatpush1.msra.mxu0 0.0
        %535 = vmatprep.subr.mxu0 0.0
        %536 = vmatpush1.msra.mxu0 0.0
        %537 = vmatprep.subr.mxu0 0.0
        %538 = vmatpush1.msra.mxu0 0.0
        %539 = vmatprep.subr.mxu0 0.0
        %540 = vmatpush1.msra.mxu0 0.0
        %541 = vmatprep.subr.mxu0 0.0
        %542 = vmatpush1.msra.mxu0 0.0
        %543 = vmatprep.subr.mxu0 0.0
        %544 = vmatpush1.msra.mxu0 0.0
        %545 = vmatprep.subr.mxu0 0.0
        %546 = vmatpush1.msra.mxu0 0.0
        %547 = vmatprep.subr.mxu0 0.0
        %548 = vmatpush1.msra.mxu0 0.0
        %549 = vmatprep.subr.mxu0 0.0
        %550 = vmatpush1.msra.mxu0 0.0
        %551 = vmatprep.subr.mxu0 0.0
        %552 = vmatpush1.msra.mxu0 0.0
        %553 = vmatprep.subr.mxu0 0.0
        %554 = vmatpush1.msra.mxu0 0.0
        %555 = vmatprep.subr.mxu0 0.0
        %556 = vmatpush1.msra.mxu0 0.0
        %557 = vmatprep.subr.mxu0 0.0
        %558 = vmatpush1.msra.mxu0 0.0
        %559 = vmatprep.subr.mxu0 0.0
        %560 = vmatpush1.msra.mxu0 0.0
        %561 = vmatprep.subr.mxu0 0.0
        %562 = vmatpush1.msra.mxu0 0.0
        %563 = vmatprep.mubr.f32.mxu0 0.0
        %564 = vmatmul.mubr.f32.gmra.mrb[0].mxu0 %v491
        %v565 = vpop.f32.mrb[0].mxu0
        %v566 = vadd.f32 0.0, %v565
        %v567 = vpop.f32.mrb[0].mxu0
        %v568 = vadd.f32 0.0, %v567
        %569 = vdwg.mxu0
        %v570 = vld [vmem:[%s2] sm:$0xff]
        %572 = vset.pattern.permute.xlu0 0
        %573 = vperm.xlu0 %572, %v570
        %v574 = vpop.permute.xlu0 %573
        %v576 = vmul.f32 %v566, %v574
        %v577 = vmul.f32 %v568, %v574
        %v578 = vld [vmem:[%s3] sm:$0xff]
        %580 = vset.pattern.permute.xlu0 0
        %581 = vperm.xlu0 %580, %v578
        %v582 = vpop.permute.xlu0 %581
        %v584 = vadd.f32 %v576, %v582
        %v585 = vadd.f32 %v577, %v582
        %v586 = vmax.f32 %v584, 0.0
        %v587 = vmax.f32 %v585, 0.0
        %v588 = vld [vmem:[%s4] sm:$0xff]
        %589 = vrot.lane.b32.xlu0 %v586, 17
        %v590 = vpop.permute.xlu0 %589
        %591 = vrot.lane.b32.xlu0 %v587, 17
        %v592 = vpop.permute.xlu0 %591
        %v593 = vsel %vm388, %v590, %v592
        %v594 = vsel %vm388, %v592, %v590
        %v595 = vmul.f32 %v594, %v340
        %v596 = vmul.f32 %v593, %v341
        %597 = vrot.lane.b32.xlu0 %v586, 16
        %v598 = vpop.permute.xlu0 %597
        %599 = vrot.lane.b32.xlu0 %v587, 16
        %v600 = vpop.permute.xlu0 %599
        %v601 = vsel %vm397, %v598, %v600
        %v602 = vsel %vm397, %v600, %v598
        %v603 = vmul.f32 %v602, %v344
        %v604 = vmul.f32 %v601, %v345
        %605 = vrot.lane.b32.xlu0 %v586, 15
        %v606 = vpop.permute.xlu0 %605
        %607 = vrot.lane.b32.xlu0 %v587, 15
        %v608 = vpop.permute.xlu0 %607
        %v609 = vsel %vm406, %v606, %v608
        %v610 = vsel %vm406, %v608, %v606
        %v611 = vmul.f32 %v610, %v352
        %v612 = vmul.f32 %v609, %v353
        %613 = vrot.lane.b32.xlu0 %v586, 1
        %v614 = vpop.permute.xlu0 %613
        %615 = vrot.lane.b32.xlu0 %v587, 1
        %v616 = vpop.permute.xlu0 %615
        %v617 = vsel %vm415, %v614, %v616
        %v618 = vsel %vm415, %v616, %v614
        %v619 = vmul.f32 %v618, %v356
        %v620 = vmul.f32 %v617, %v357
        %621 = vrot.lane.b32.xlu0 %v586, 127
        %v622 = vpop.permute.xlu0 %621
        %623 = vrot.lane.b32.xlu0 %v587, 127
        %v624 = vpop.permute.xlu0 %623
        %v625 = vsel %vm424, %v622, %v624
        %v626 = vsel %vm424, %v624, %v622
        %v627 = vmul.f32 %v625, %v360
        %v628 = vmul.f32 %v626, %v361
        %629 = vrot.lane.b32.xlu0 %v586, 113
        %v630 = vpop.permute.xlu0 %629
        %631 = vrot.lane.b32.xlu0 %v587, 113
        %v632 = vpop.permute.xlu0 %631
        %v633 = vsel %vm433, %v630, %v632
        %v634 = vsel %vm433, %v632, %v630
        %v635 = vmul.f32 %v633, %v368
        %v636 = vmul.f32 %v634, %v369
        %637 = vrot.lane.b32.xlu0 %v586, 112
        %v638 = vpop.permute.xlu0 %637
        %639 = vrot.lane.b32.xlu0 %v587, 112
        %v640 = vpop.permute.xlu0 %639
        %v641 = vsel %vm442, %v638, %v640
        %v642 = vsel %vm442, %v640, %v638
        %v643 = vmul.f32 %v641, %v372
        %v644 = vmul.f32 %v642, %v373
        %645 = vrot.lane.b32.xlu0 %v586, 111
        %v646 = vpop.permute.xlu0 %645
        %647 = vrot.lane.b32.xlu0 %v587, 111
        %v648 = vpop.permute.xlu0 %647
        %v649 = vsel %vm451, %v646, %v648
        %v650 = vsel %vm451, %v648, %v646
        %v651 = vmul.f32 %v649, %v378
        %v652 = vmul.f32 %v650, %v379
        %vm653 = vcmask 588800
        %v655 = vsel %vm653, %v588, 0
        %657 = vmatprep.subr.mxu0 %v596
        %658 = vmatpush1.msra.mxu0 %v595
        %659 = vmatprep.subr.mxu0 %v604
        %660 = vmatpush1.msra.mxu0 %v603
        %661 = vmatprep.subr.mxu0 %v612
        %662 = vmatpush1.msra.mxu0 %v611
        %663 = vmatprep.subr.mxu0 %v620
        %664 = vmatpush1.msra.mxu0 %v619
        %665 = vmatprep.subr.mxu0 %v587
        %666 = vmatpush1.msra.mxu0 %v586
        %667 = vmatprep.subr.mxu0 %v628
        %668 = vmatpush1.msra.mxu0 %v627
        %669 = vmatprep.subr.mxu0 %v636
        %670 = vmatpush1.msra.mxu0 %v635
        %671 = vmatprep.subr.mxu0 %v644
        %672 = vmatpush1.msra.mxu0 %v643
        %673 = vmatprep.subr.mxu0 %v652
        %674 = vmatpush1.msra.mxu0 %v651
        %675 = vmatprep.subr.mxu0 0.0
        %676 = vmatpush1.msra.mxu0 0.0
        %677 = vmatprep.subr.mxu0 0.0
        %678 = vmatpush1.msra.mxu0 0.0
        %679 = vmatprep.subr.mxu0 0.0
        %680 = vmatpush1.msra.mxu0 0.0
        %681 = vmatprep.subr.mxu0 0.0
        %682 = vmatpush1.msra.mxu0 0.0
        %683 = vmatprep.subr.mxu0 0.0
        %684 = vmatpush1.msra.mxu0 0.0
        %685 = vmatprep.subr.mxu0 0.0
        %686 = vmatpush1.msra.mxu0 0.0
        %687 = vmatprep.subr.mxu0 0.0
        %688 = vmatpush1.msra.mxu0 0.0
        %689 = vmatprep.subr.mxu0 0.0
        %690 = vmatpush1.msra.mxu0 0.0
        %691 = vmatprep.subr.mxu0 0.0
        %692 = vmatpush1.msra.mxu0 0.0
        %693 = vmatprep.subr.mxu0 0.0
        %694 = vmatpush1.msra.mxu0 0.0
        %695 = vmatprep.subr.mxu0 0.0
        %696 = vmatpush1.msra.mxu0 0.0
        %697 = vmatprep.subr.mxu0 0.0
        %698 = vmatpush1.msra.mxu0 0.0
        %699 = vmatprep.subr.mxu0 0.0
        %700 = vmatpush1.msra.mxu0 0.0
        %701 = vmatprep.subr.mxu0 0.0
        %702 = vmatpush1.msra.mxu0 0.0
        %703 = vmatprep.subr.mxu0 0.0
        %704 = vmatpush1.msra.mxu0 0.0
        %705 = vmatprep.subr.mxu0 0.0
        %706 = vmatpush1.msra.mxu0 0.0
        %707 = vmatprep.subr.mxu0 0.0
        %708 = vmatpush1.msra.mxu0 0.0
        %709 = vmatprep.subr.mxu0 0.0
        %710 = vmatpush1.msra.mxu0 0.0
        %711 = vmatprep.subr.mxu0 0.0
        %712 = vmatpush1.msra.mxu0 0.0
        %713 = vmatprep.subr.mxu0 0.0
        %714 = vmatpush1.msra.mxu0 0.0
        %715 = vmatprep.subr.mxu0 0.0
        %716 = vmatpush1.msra.mxu0 0.0
        %717 = vmatprep.subr.mxu0 0.0
        %718 = vmatpush1.msra.mxu0 0.0
        %719 = vmatprep.subr.mxu0 0.0
        %720 = vmatpush1.msra.mxu0 0.0
        %721 = vmatprep.mubr.f32.mxu0 0.0
        %722 = vmatmul.mubr.f32.gmra.mrb[0].mxu0 %v655
        %v723 = vpop.f32.mrb[0].mxu0
        %v724 = vadd.f32 0.0, %v723
        %v725 = vpop.f32.mrb[0].mxu0
        %v726 = vadd.f32 0.0, %v725
        %727 = vdwg.mxu0
        %v728 = vld [vmem:[%s7] sm:$0xff]
        %vm729 = vcmask 31744
        %v731 = vsel %vm729, %v728, 0
        %v733 = vsel %vm480, %v304, 0
        %v735 = vsel %vm480, %v382, 0
        %737 = vmatprep.subr.mxu0 %v735
        %738 = vmatpush1.msra.mxu0 %v733
        %739 = vmatprep.subr.mxu0 0.0
        %740 = vmatpush1.msra.mxu0 0.0
        %741 = vmatprep.subr.mxu0 0.0
        %742 = vmatpush1.msra.mxu0 0.0
        %743 = vmatprep.subr.mxu0 0.0
        %744 = vmatpush1.msra.mxu0 0.0
        %745 = vmatprep.subr.mxu0 0.0
        %746 = vmatpush1.msra.mxu0 0.0
        %747 = vmatprep.subr.mxu0 0.0
        %748 = vmatpush1.msra.mxu0 0.0
        %749 = vmatprep.subr.mxu0 0.0
        %750 = vmatpush1.msra.mxu0 0.0
        %751 = vmatprep.subr.mxu0 0.0
        %752 = vmatpush1.msra.mxu0 0.0
        %753 = vmatprep.subr.mxu0 0.0
        %754 = vmatpush1.msra.mxu0 0.0
        %755 = vmatprep.subr.mxu0 0.0
        %756 = vmatpush1.msra.mxu0 0.0
        %757 = vmatprep.subr.mxu0 0.0
        %758 = vmatpush1.msra.mxu0 0.0
        %759 = vmatprep.subr.mxu0 0.0
        %760 = vmatpush1.msra.mxu0 0.0
        %761 = vmatprep.subr.mxu0 0.0
        %762 = vmatpush1.msra.mxu0 0.0
        %763 = vmatprep.subr.mxu0 0.0
        %764 = vmatpush1.msra.mxu0 0.0
        %765 = vmatprep.subr.mxu0 0.0
        %766 = vmatpush1.msra.mxu0 0.0
        %767 = vmatprep.subr.mxu0 0.0
        %768 = vmatpush1.msra.mxu0 0.0
        %769 = vmatprep.subr.mxu0 0.0
        %770 = vmatpush1.msra.mxu0 0.0
        %771 = vmatprep.subr.mxu0 0.0
        %772 = vmatpush1.msra.mxu0 0.0
        %773 = vmatprep.subr.mxu0 0.0
        %774 = vmatpush1.msra.mxu0 0.0
        %775 = vmatprep.subr.mxu0 0.0
        %776 = vmatpush1.msra.mxu0 0.0
        %777 = vmatprep.subr.mxu0 0.0
        %778 = vmatpush1.msra.mxu0 0.0
        %779 = vmatprep.subr.mxu0 0.0
        %780 = vmatpush1.msra.mxu0 0.0
        %781 = vmatprep.subr.mxu0 0.0
        %782 = vmatpush1.msra.mxu0 0.0
        %783 = vmatprep.subr.mxu0 0.0
        %784 = vmatpush1.msra.mxu0 0.0
        %785 = vmatprep.subr.mxu0 0.0
        %786 = vmatpush1.msra.mxu0 0.0
        %787 = vmatprep.subr.mxu0 0.0
        %788 = vmatpush1.msra.mxu0 0.0
        %789 = vmatprep.subr.mxu0 0.0
        %790 = vmatpush1.msra.mxu0 0.0
        %791 = vmatprep.subr.mxu0 0.0
        %792 = vmatpush1.msra.mxu0 0.0
        %793 = vmatprep.subr.mxu0 0.0
        %794 = vmatpush1.msra.mxu0 0.0
        %795 = vmatprep.subr.mxu0 0.0
        %796 = vmatpush1.msra.mxu0 0.0
        %797 = vmatprep.subr.mxu0 0.0
        %798 = vmatpush1.msra.mxu0 0.0
        %799 = vmatprep.subr.mxu0 0.0
        %800 = vmatpush1.msra.mxu0 0.0
        %801 = vmatprep.mubr.f32.mxu0 0.0
        %802 = vmatmul.mubr.f32.gmra.mrb[0].mxu0 %v731
        %v803 = vpop.f32.mrb[0].mxu0
        %v804 = vadd.f32 0.0, %v803
        %v805 = vpop.f32.mrb[0].mxu0
        %v806 = vadd.f32 0.0, %v805
        %807 = vdwg.mxu0
        %v808 = vld [vmem:[%s5] sm:$0xff]
        %810 = vset.pattern.permute.xlu0 0
        %811 = vperm.xlu0 %810, %v808
        %v812 = vpop.permute.xlu0 %811
        %v814 = vmul.f32 %v724, %v812
        %v815 = vmul.f32 %v726, %v812
        %v816 = vadd.f32 %v814, %v804
        %v817 = vadd.f32 %v815, %v806
        %v818 = vld [vmem:[%s6] sm:$0xff]
        %820 = vset.pattern.permute.xlu0 0
        %821 = vperm.xlu0 %820, %v818
        %v822 = vpop.permute.xlu0 %821
        %v824 = vadd.f32 %v816, %v822
        %v825 = vadd.f32 %v817, %v822
        %v826 = vmax.f32 %v824, 0.0
        %v827 = vmax.f32 %v825, 0.0
        %828 = vst [vmem:[%s298] sm:$0xff] %v826
        %829 = vst [vmem:[%s298 + $0x8] sm:$0xff] %v827
        %s830 = sand.u32 %s203, 1
        %s831 = scalar_lea.sflag [#allocation3], %s830
        %s832 = sand.u32 %s203, 1
        %s833 = smul.addr %s832, 16
        %s834 = scalar_lea.vmem [#allocation2], %s833
        // Predicated region
        $region53: #{tpu_custom_call.1} parent=51 // pred_check
          %p835 = pneg %p213
        $region54: #{tpu_custom_call.1} parent=51 // pred_check_branch
          %837 = sbr.rel (%p835) target = $region56
        $region55: #{tpu_custom_call.1} parent=51 // pred_region
          %s839 = ssub.s32 256, 256
          %840 = vsyncadd %s831, %s839
          %s841 = smul.addr %s22, 2
          %s842 = smul.addr %s841, 128
          %s843 = scalar_lea.hbm %s8, %s842
          %s845 = sshll.u32 %s834, 4
          %s846 = int_to_ptr.vmem [resolvable:$true] %s845
          %848 = dma.vmem_to_hbm [thread:$0]  %s846, 256, %s843, %s831
        $region56: #{tpu_custom_call.1} parent=51 // pred_fallthru
          _
      $region52: #{tpu_custom_call.1} parent=5 // pred_fallthru
        _
      %p849 = scmp.le.s32.totalorder 2, %s17
      // Predicated region
      $region57: #{tpu_custom_call.1} parent=5 // pred_check
        %p850 = pneg %p849
      $region58: #{tpu_custom_call.1} parent=5 // pred_check_branch
        %852 = sbr.rel (%p850) target = $region60
      $region59: #{tpu_custom_call.1} parent=5 // pred_region
        %s853 = ssub.s32 %s17, 2
        // Predicated region
        $region61: #{tpu_custom_call.1} parent=59 // pred_check
          %p854 = pneg %p219
        $region62: #{tpu_custom_call.1} parent=59 // pred_check_branch
          %856 = sbr.rel (%p854) target = $region64
        $region63: #{tpu_custom_call.1} parent=59 // pred_region
          %s857 = sand.u32 %s204, 1
          %s858 = scalar_lea.sflag [#allocation3], %s857
          %s859 = sand.u32 %s204, 1
          %s860 = smul.addr %s859, 16
          %s861 = scalar_lea.vmem [#allocation2], %s860
          %862 = dma.done %s858, 256
        $region64: #{tpu_custom_call.1} parent=59 // pred_fallthru
          _
      $region60: #{tpu_custom_call.1} parent=5 // pred_fallthru
        _
    $region6: #{tpu_custom_call.1} parent=1 // loop_footer
      %s21 = sadd.s32 1, %s17
    $region7: #{tpu_custom_call.1} parent=1 // loop_footer_branch
      %16 = sbr.rel target = $region3
    $region8: #{tpu_custom_call.1} parent=1 // loop_exit
      _
    %863 = vsyncpa [#allocation3], 1
    %s864 = scalar_lea.sflag [#allocation3], 1
    %865 = vsyncpa %s864, 1

</llo_original>
